<compile_context>
chip_gen: v7x
topology: tpu7x:2x2x1
jax: 0.10.0
libtpu: 0.0.40
codegen_flags: <defaults>
</compile_context>

<pallas_src>
import functools

import jax
import jax.numpy as jnp
from jax.experimental import pallas as pl
from jax.experimental.pallas import tpu as pltpu

NEG_SLOPE = 0.001
LANE = 128  # lane width: all feature dims are zero-padded to this inside the slabs


def _leaky_relu(x, negative_slope=NEG_SLOPE):
    return jnp.where(x >= 0, x, negative_slope * x)


def _mlp_kernel(s_ref, a_ref, w1_ref, w_ref, b_ref, out_ref):
    # s_ref, a_ref : (TB, state_dim)          activation tile
    # w1_ref       : (2, state_dim, LANE)     layer-1 halves, pre-transposed (in, out)
    # w_ref        : (5, LANE, LANE)          layers 2..6, pre-transposed, zero padded
    # b_ref        : (6, LANE)                biases, zero padded
    # out_ref      : (TB, LANE)               lane-dense output (sliced in wrapper)
    b = b_ref[...]

    # layer 1: fused concat -> two MXU dots
    h = (jnp.dot(s_ref[...], w1_ref[0], preferred_element_type=jnp.float32)
         + jnp.dot(a_ref[...], w1_ref[1], preferred_element_type=jnp.float32)
         + b[0:1, :])
    h = _leaky_relu(h)

    # layers 2..5 (static Python unroll)
    for l in range(4):
        h = _leaky_relu(
            jnp.dot(h, w_ref[l], preferred_element_type=jnp.float32)
            + b[l + 1:l + 2, :])

    # layer 6: no activation
    h = jnp.dot(h, w_ref[4], preferred_element_type=jnp.float32) + b[5:6, :]
    out_ref[...] = h.astype(out_ref.dtype)


def init_params(key, state_dim, hidden_dim, action_dim, dtype=jnp.float32):
    """PyTorch-style params: W ~ N(0, 0.01) with shape (out, in), b = 0."""
    dims = [(2 * state_dim, hidden_dim),
            (hidden_dim, hidden_dim),
            (hidden_dim, hidden_dim),
            (hidden_dim, hidden_dim),
            (hidden_dim, hidden_dim),
            (hidden_dim, action_dim)]
    params = []
    for fan_in, fan_out in dims:
        key, wk = jax.random.split(key)
        w = 0.01 * jax.random.normal(wk, (fan_out, fan_in), dtype=dtype)  # (out, in)
        b = jnp.zeros((fan_out,), dtype=dtype)
        params.append((w, b))
    return params


def pack_params(params, state_dim, hidden_dim, action_dim, dtype=jnp.float32):
    """One-time layout plumbing: transpose to (in, out) and pack into padded slabs."""
    w1, b1 = params[0]  # (hidden, 2*state_dim)
    w1_packed = jnp.zeros((2, state_dim, LANE), dtype)
    w1_packed = w1_packed.at[0, :, :hidden_dim].set(w1[:, :state_dim].T)
    w1_packed = w1_packed.at[1, :, :hidden_dim].set(w1[:, state_dim:].T)

    w_packed = jnp.zeros((5, LANE, LANE), dtype)
    b_packed = jnp.zeros((6, LANE), dtype)
    b_packed = b_packed.at[0, :hidden_dim].set(b1.reshape(-1))
    for idx, (w, b) in enumerate(params[1:]):
        out_dim, in_dim = w.shape
        w_packed = w_packed.at[idx, :in_dim, :out_dim].set(w.T)
        b_packed = b_packed.at[idx + 1, :out_dim].set(b.reshape(-1))
    return w1_packed, w_packed, b_packed


@functools.partial(jax.jit, static_argnames=("action_dim",))
def inv_dynamics_continuous_forward(s, a, w1_packed, w_packed, b_packed, *, action_dim):
    batch, state_dim = s.shape
    feat = w_packed.shape[-1]

    # Batch tiling: single block for small batches; 512-row tiles when large so
    # activation DMA pipelines behind the 6 matmuls while weights stay resident.
    tb = batch if batch <= 512 else 512
    grid = (pl.cdiv(batch, tb),)

    in_specs = [
        pl.BlockSpec((tb, state_dim), lambda i: (i, 0)),           # s tile
        pl.BlockSpec((tb, state_dim), lambda i: (i, 0)),           # a tile
        pl.BlockSpec(w1_packed.shape, lambda i: (0, 0, 0)),        # resident weights
        pl.BlockSpec(w_packed.shape, lambda i: (0, 0, 0)),
        pl.BlockSpec(b_packed.shape, lambda i: (0, 0)),
    ]
    out_specs = pl.BlockSpec((tb, feat), lambda i: (i, 0))         # lane-dense output

    out_padded = pl.pallas_call(
        _mlp_kernel,
        out_shape=jax.ShapeDtypeStruct((batch, feat), s.dtype),
        grid=grid,
        in_specs=in_specs,
        out_specs=out_specs,
        compiler_params=pltpu.CompilerParams(
            dimension_semantics=("parallel",)),                    # shards over v7x's 2 TCs
    )(s, a, w1_packed, w_packed, b_packed)

    return out_padded[:, :action_dim]


def _reference_forward(s, a, params):
    x = jnp.concatenate([s, a], axis=1)
    for i, (w, b) in enumerate(params):
        x = x @ w.T + b
        if i < len(params) - 1:
            x = jnp.where(x >= 0, x, NEG_SLOPE * x)
    return x


if __name__ == "__main__":
    state_dim, hidden_dim, action_dim = 16, 32, 8
    batch = 8

    key = jax.random.PRNGKey(0)
    k_params, k_s, k_a = jax.random.split(key, 3)

    params = init_params(k_params, state_dim, hidden_dim, action_dim)
    w1_packed, w_packed, b_packed = pack_params(params, state_dim, hidden_dim, action_dim)

    s = jax.random.normal(k_s, (batch, state_dim), dtype=jnp.float32)
    a = jax.random.normal(k_a, (batch, state_dim), dtype=jnp.float32)  # second state s'

    out = inv_dynamics_continuous_forward(
        s, a, w1_packed, w_packed, b_packed, action_dim=action_dim)
    out = jax.block_until_ready(out)

    ref = _reference_forward(s, a, params)
    assert out.shape == (batch, action_dim)
    assert jnp.allclose(out, ref, atol=1e-5, rtol=1e-5), "mismatch vs reference"

    print("KERNEL_OK")
</pallas_src>

<mosaic_0001>
module attributes {stable_mosaic.version = 11 : i64} {
  func.func @_mlp_kernel(%arg0: i32, %arg1: memref<8x16xf32, #tpu.memory_space<vmem>>, %arg2: memref<8x16xf32, #tpu.memory_space<vmem>>, %arg3: memref<2x16x128xf32, #tpu.memory_space<vmem>>, %arg4: memref<5x128x128xf32, #tpu.memory_space<vmem>>, %arg5: memref<6x128xf32, #tpu.memory_space<vmem>>, %arg6: memref<8x128xf32, #tpu.memory_space<vmem>>) attributes {dimension_semantics = [#tpu.dimension_semantics<parallel>], iteration_bounds = array<i64: 1>, scalar_prefetch = 0 : i64, scratch_operands = 0 : i64, tpu.core_type = #tpu.core_type<tc>, window_params = [{transform_indices = @transform_0, window_bounds = array<i64: 8, 16>}, {transform_indices = @transform_1, window_bounds = array<i64: 8, 16>}, {pipeline_mode = #tpu.pipeline_mode<synchronous>, transform_indices = @transform_2, window_bounds = array<i64: 2, 16, 128>}, {pipeline_mode = #tpu.pipeline_mode<synchronous>, transform_indices = @transform_3, window_bounds = array<i64: 5, 128, 128>}, {pipeline_mode = #tpu.pipeline_mode<synchronous>, transform_indices = @transform_4, window_bounds = array<i64: 6, 128>}, {transform_indices = @transform_5, window_bounds = array<i64: 8, 128>}]} {
    %c0 = arith.constant 0 : index
    %c0_0 = arith.constant 0 : index
    %0 = vector.load %arg5[%c0, %c0_0] : memref<6x128xf32, #tpu.memory_space<vmem>>, vector<6x128xf32>
    %c0_1 = arith.constant 0 : index
    %c0_2 = arith.constant 0 : index
    %1 = vector.load %arg1[%c0_1, %c0_2] : memref<8x16xf32, #tpu.memory_space<vmem>>, vector<8x16xf32>
    %c0_3 = arith.constant 0 : index
    %c0_4 = arith.constant 0 : index
    %c0_5 = arith.constant 0 : index
    %2 = vector.load %arg3[%c0_3, %c0_4, %c0_5] : memref<2x16x128xf32, #tpu.memory_space<vmem>>, vector<1x16x128xf32>
    %3 = vector.shape_cast %2 : vector<1x16x128xf32> to vector<16x128xf32>
    %cst = arith.constant dense<0.000000e+00> : vector<8x128xf32>
    %4 = tpu.matmul %1, %3, %cst {dimension_numbers = #tpu.dot_dimension_numbers<[1], [0], [0], [1], [0, 0, 1, 1], [], []>} : vector<8x16xf32>, vector<16x128xf32>, vector<8x128xf32> -> vector<8x128xf32>
    %c0_6 = arith.constant 0 : index
    %c0_7 = arith.constant 0 : index
    %5 = vector.load %arg2[%c0_6, %c0_7] : memref<8x16xf32, #tpu.memory_space<vmem>>, vector<8x16xf32>
    %c1 = arith.constant 1 : index
    %c0_8 = arith.constant 0 : index
    %c0_9 = arith.constant 0 : index
    %6 = vector.load %arg3[%c1, %c0_8, %c0_9] : memref<2x16x128xf32, #tpu.memory_space<vmem>>, vector<1x16x128xf32>
    %7 = vector.shape_cast %6 : vector<1x16x128xf32> to vector<16x128xf32>
    %cst_10 = arith.constant dense<0.000000e+00> : vector<8x128xf32>
    %8 = tpu.matmul %5, %7, %cst_10 {dimension_numbers = #tpu.dot_dimension_numbers<[1], [0], [0], [1], [0, 0, 1, 1], [], []>} : vector<8x16xf32>, vector<16x128xf32>, vector<8x128xf32> -> vector<8x128xf32>
    %9 = arith.addf %4, %8 : vector<8x128xf32>
    %10 = vector.extract_strided_slice %0 {offsets = [0, 0], sizes = [1, 128], strides = [1, 1]} : vector<6x128xf32> to vector<1x128xf32>
    %11 = vector.broadcast %10 : vector<1x128xf32> to vector<8x128xf32>
    %12 = arith.addf %9, %11 : vector<8x128xf32>
    %cst_11 = arith.constant 0.000000e+00 : f32
    %13 = vector.broadcast %cst_11 : f32 to vector<8x128xf32>
    %14 = arith.cmpf oge, %12, %13 : vector<8x128xf32>
    %cst_12 = arith.constant 1.000000e-03 : f32
    %15 = vector.broadcast %cst_12 : f32 to vector<8x128xf32>
    %16 = arith.mulf %15, %12 : vector<8x128xf32>
    %17 = arith.select %14, %12, %16 : vector<8x128xi1>, vector<8x128xf32>
    %c0_13 = arith.constant 0 : index
    %c0_14 = arith.constant 0 : index
    %c0_15 = arith.constant 0 : index
    %18 = vector.load %arg4[%c0_13, %c0_14, %c0_15] : memref<5x128x128xf32, #tpu.memory_space<vmem>>, vector<1x128x128xf32>
    %19 = vector.shape_cast %18 : vector<1x128x128xf32> to vector<128x128xf32>
    %cst_16 = arith.constant dense<0.000000e+00> : vector<8x128xf32>
    %20 = tpu.matmul %17, %19, %cst_16 {dimension_numbers = #tpu.dot_dimension_numbers<[1], [0], [0], [1], [0, 0, 1, 1], [], []>} : vector<8x128xf32>, vector<128x128xf32>, vector<8x128xf32> -> vector<8x128xf32>
    %21 = vector.extract_strided_slice %0 {offsets = [1, 0], sizes = [1, 128], strides = [1, 1]} : vector<6x128xf32> to vector<1x128xf32>
    %22 = vector.broadcast %21 : vector<1x128xf32> to vector<8x128xf32>
    %23 = arith.addf %20, %22 : vector<8x128xf32>
    %cst_17 = arith.constant 0.000000e+00 : f32
    %24 = vector.broadcast %cst_17 : f32 to vector<8x128xf32>
    %25 = arith.cmpf oge, %23, %24 : vector<8x128xf32>
    %cst_18 = arith.constant 1.000000e-03 : f32
    %26 = vector.broadcast %cst_18 : f32 to vector<8x128xf32>
    %27 = arith.mulf %26, %23 : vector<8x128xf32>
    %28 = arith.select %25, %23, %27 : vector<8x128xi1>, vector<8x128xf32>
    %c1_19 = arith.constant 1 : index
    %c0_20 = arith.constant 0 : index
    %c0_21 = arith.constant 0 : index
    %29 = vector.load %arg4[%c1_19, %c0_20, %c0_21] : memref<5x128x128xf32, #tpu.memory_space<vmem>>, vector<1x128x128xf32>
    %30 = vector.shape_cast %29 : vector<1x128x128xf32> to vector<128x128xf32>
    %cst_22 = arith.constant dense<0.000000e+00> : vector<8x128xf32>
    %31 = tpu.matmul %28, %30, %cst_22 {dimension_numbers = #tpu.dot_dimension_numbers<[1], [0], [0], [1], [0, 0, 1, 1], [], []>} : vector<8x128xf32>, vector<128x128xf32>, vector<8x128xf32> -> vector<8x128xf32>
    %32 = vector.extract_strided_slice %0 {offsets = [2, 0], sizes = [1, 128], strides = [1, 1]} : vector<6x128xf32> to vector<1x128xf32>
    %33 = vector.broadcast %32 : vector<1x128xf32> to vector<8x128xf32>
    %34 = arith.addf %31, %33 : vector<8x128xf32>
    %cst_23 = arith.constant 0.000000e+00 : f32
    %35 = vector.broadcast %cst_23 : f32 to vector<8x128xf32>
    %36 = arith.cmpf oge, %34, %35 : vector<8x128xf32>
    %cst_24 = arith.constant 1.000000e-03 : f32
    %37 = vector.broadcast %cst_24 : f32 to vector<8x128xf32>
    %38 = arith.mulf %37, %34 : vector<8x128xf32>
    %39 = arith.select %36, %34, %38 : vector<8x128xi1>, vector<8x128xf32>
    %c2 = arith.constant 2 : index
    %c0_25 = arith.constant 0 : index
    %c0_26 = arith.constant 0 : index
    %40 = vector.load %arg4[%c2, %c0_25, %c0_26] : memref<5x128x128xf32, #tpu.memory_space<vmem>>, vector<1x128x128xf32>
    %41 = vector.shape_cast %40 : vector<1x128x128xf32> to vector<128x128xf32>
    %cst_27 = arith.constant dense<0.000000e+00> : vector<8x128xf32>
    %42 = tpu.matmul %39, %41, %cst_27 {dimension_numbers = #tpu.dot_dimension_numbers<[1], [0], [0], [1], [0, 0, 1, 1], [], []>} : vector<8x128xf32>, vector<128x128xf32>, vector<8x128xf32> -> vector<8x128xf32>
    %43 = vector.extract_strided_slice %0 {offsets = [3, 0], sizes = [1, 128], strides = [1, 1]} : vector<6x128xf32> to vector<1x128xf32>
    %44 = vector.broadcast %43 : vector<1x128xf32> to vector<8x128xf32>
    %45 = arith.addf %42, %44 : vector<8x128xf32>
    %cst_28 = arith.constant 0.000000e+00 : f32
    %46 = vector.broadcast %cst_28 : f32 to vector<8x128xf32>
    %47 = arith.cmpf oge, %45, %46 : vector<8x128xf32>
    %cst_29 = arith.constant 1.000000e-03 : f32
    %48 = vector.broadcast %cst_29 : f32 to vector<8x128xf32>
    %49 = arith.mulf %48, %45 : vector<8x128xf32>
    %50 = arith.select %47, %45, %49 : vector<8x128xi1>, vector<8x128xf32>
    %c3 = arith.constant 3 : index
    %c0_30 = arith.constant 0 : index
    %c0_31 = arith.constant 0 : index
    %51 = vector.load %arg4[%c3, %c0_30, %c0_31] : memref<5x128x128xf32, #tpu.memory_space<vmem>>, vector<1x128x128xf32>
    %52 = vector.shape_cast %51 : vector<1x128x128xf32> to vector<128x128xf32>
    %cst_32 = arith.constant dense<0.000000e+00> : vector<8x128xf32>
    %53 = tpu.matmul %50, %52, %cst_32 {dimension_numbers = #tpu.dot_dimension_numbers<[1], [0], [0], [1], [0, 0, 1, 1], [], []>} : vector<8x128xf32>, vector<128x128xf32>, vector<8x128xf32> -> vector<8x128xf32>
    %54 = vector.extract_strided_slice %0 {offsets = [4, 0], sizes = [1, 128], strides = [1, 1]} : vector<6x128xf32> to vector<1x128xf32>
    %55 = vector.broadcast %54 : vector<1x128xf32> to vector<8x128xf32>
    %56 = arith.addf %53, %55 : vector<8x128xf32>
    %cst_33 = arith.constant 0.000000e+00 : f32
    %57 = vector.broadcast %cst_33 : f32 to vector<8x128xf32>
    %58 = arith.cmpf oge, %56, %57 : vector<8x128xf32>
    %cst_34 = arith.constant 1.000000e-03 : f32
    %59 = vector.broadcast %cst_34 : f32 to vector<8x128xf32>
    %60 = arith.mulf %59, %56 : vector<8x128xf32>
    %61 = arith.select %58, %56, %60 : vector<8x128xi1>, vector<8x128xf32>
    %c4 = arith.constant 4 : index
    %c0_35 = arith.constant 0 : index
    %c0_36 = arith.constant 0 : index
    %62 = vector.load %arg4[%c4, %c0_35, %c0_36] : memref<5x128x128xf32, #tpu.memory_space<vmem>>, vector<1x128x128xf32>
    %63 = vector.shape_cast %62 : vector<1x128x128xf32> to vector<128x128xf32>
    %cst_37 = arith.constant dense<0.000000e+00> : vector<8x128xf32>
    %64 = tpu.matmul %61, %63, %cst_37 {dimension_numbers = #tpu.dot_dimension_numbers<[1], [0], [0], [1], [0, 0, 1, 1], [], []>} : vector<8x128xf32>, vector<128x128xf32>, vector<8x128xf32> -> vector<8x128xf32>
    %65 = vector.extract_strided_slice %0 {offsets = [5, 0], sizes = [1, 128], strides = [1, 1]} : vector<6x128xf32> to vector<1x128xf32>
    %66 = vector.broadcast %65 : vector<1x128xf32> to vector<8x128xf32>
    %67 = arith.addf %64, %66 : vector<8x128xf32>
    %c0_38 = arith.constant 0 : index
    %c0_39 = arith.constant 0 : index
    %68 = vector.load %arg6[%c0_38, %c0_39] : memref<8x128xf32, #tpu.memory_space<vmem>>, vector<8x128xf32>
    tpu.vector_store %arg6[%c0_38, %c0_39], %67 {strides = array<i32>} : memref<8x128xf32, #tpu.memory_space<vmem>>, vector<8x128xf32>,
    return
  }
  func.func @transform_0(%arg0: i32) -> (i32, i32) {
    %c0_i32 = arith.constant 0 : i32
    %c0_i32_0 = arith.constant 0 : i32
    return %arg0, %c0_i32 : i32, i32
  }
  func.func @transform_1(%arg0: i32) -> (i32, i32) {
    %c0_i32 = arith.constant 0 : i32
    %c0_i32_0 = arith.constant 0 : i32
    return %arg0, %c0_i32 : i32, i32
  }
  func.func @transform_2(%arg0: i32) -> (i32, i32, i32) {
    %c0_i32 = arith.constant 0 : i32
    %c0_i32_0 = arith.constant 0 : i32
    %c0_i32_1 = arith.constant 0 : i32
    %c0_i32_2 = arith.constant 0 : i32
    return %c0_i32, %c0_i32_0, %c0_i32_1 : i32, i32, i32
  }
  func.func @transform_3(%arg0: i32) -> (i32, i32, i32) {
    %c0_i32 = arith.constant 0 : i32
    %c0_i32_0 = arith.constant 0 : i32
    %c0_i32_1 = arith.constant 0 : i32
    %c0_i32_2 = arith.constant 0 : i32
    return %c0_i32, %c0_i32_0, %c0_i32_1 : i32, i32, i32
  }
  func.func @transform_4(%arg0: i32) -> (i32, i32) {
    %c0_i32 = arith.constant 0 : i32
    %c0_i32_0 = arith.constant 0 : i32
    %c0_i32_1 = arith.constant 0 : i32
    return %c0_i32, %c0_i32_0 : i32, i32
  }
  func.func @transform_5(%arg0: i32) -> (i32, i32) {
    %c0_i32 = arith.constant 0 : i32
    %c0_i32_0 = arith.constant 0 : i32
    return %arg0, %c0_i32 : i32, i32
  }
}

</mosaic_0001>

<llo_original>
// kernel: inv_dynamics_continuous_forward.1
$region0: #{inv_dynamics_continuous_forward.1}
  #allocation0 [shape = 'u32[]', space=smem, size = 0x4, offset = 0x4, fixed_abs, tag = 'smem constant byte address 0x4 - core index']
  #allocation1 [shape = 'u32[144,128]{1,0:T(1,128)}', space=vmem, size = 0x12000, scoped, tag = 'internal scratch']
  %s0 = inlined_call_operand.hbm [shape: f32[8,16], index: 0, kind: input, shape index: {}]
  %s1 = inlined_call_operand.hbm [shape: f32[8,16], index: 1, kind: input, shape index: {}]
  %s2 = inlined_call_operand.hbm [shape: f32[2,16,128], index: 2, kind: input, shape index: {}]
  %s3 = inlined_call_operand.hbm [shape: f32[5,128,128], index: 3, kind: input, shape index: {}]
  %s4 = inlined_call_operand.vmem [shape: f32[6,128], index: 4, kind: input, shape index: {}]
  %s5 = inlined_call_operand.hbm [shape: f32[8,128], index: 5, kind: output, shape index: {}]
  %s6 = sld [smem:[#allocation0]]
  $region46: #{inv_dynamics_continuous_forward.1} parent=0
    _
  %s8 = ssub.s32 1, %s6
  %s9 = scalar_select 0, %s8, %s6
  $region1: #{inv_dynamics_continuous_forward.1} parent=0
    #allocation2 [shape = 'u8[4096]{0}', space=vmem, size = 0x1000, scoped, tag = 'input window, operand 0, single buffered']
    #allocation3 [shape = 's32[1]{0}', space=sflag, size = 0x4, scoped, tag = 'scoped memory for inv_dynamics_continuous_forward.1']
    #allocation4 [shape = 's32[1]{0}', space=sflag, size = 0x4, scoped, tag = 'scoped memory for inv_dynamics_continuous_forward.1']
    #allocation5 [shape = 'u8[4096]{0}', space=vmem, size = 0x1000, scoped, tag = 'input window, operand 1, single buffered']
    #allocation6 [shape = 's32[1]{0}', space=sflag, size = 0x4, scoped, tag = 'scoped memory for inv_dynamics_continuous_forward.1']
    #allocation7 [shape = 'u8[16384]{0}', space=vmem, size = 0x4000, scoped, tag = 'input window, operand 2, single buffered']
    #allocation8 [shape = 'u8[327680]{0}', space=vmem, size = 0x50000, scoped, tag = 'input window, operand 3, single buffered']
    #allocation9 [shape = 's32[1]{0}', space=sflag, size = 0x4, scoped, tag = 'scoped memory for inv_dynamics_continuous_forward.1']
    #allocation10 [shape = 'u8[4096]{0}', space=vmem, size = 0x1000, scoped, tag = 'output window, operand 0, single buffered']
    %10 = vsyncpa [#allocation3], 0
    %11 = vsyncpa [#allocation6], 0
    %12 = vsyncpa [#allocation9], 0
    %13 = vsyncpa [#allocation4], 0
    // Predicated region
    $region2: #{inv_dynamics_continuous_forward.1} parent=1 // pred_check
      _
    $region3: #{inv_dynamics_continuous_forward.1} parent=1 // pred_check_branch
      %15 = sbr.rel (0) target = $region5
    $region4: #{inv_dynamics_continuous_forward.1} parent=1 // pred_region
      %s17 = ssub.s32 128, 128
      %18 = vsyncadd [#allocation3], %s17
      %s20 = sshll.u32 [#allocation2], 4
      %s21 = int_to_ptr.vmem [resolvable:$true] %s20
      %23 = dma.hbm_to_vmem [thread:$0]  %s0, 128, %s21, [#allocation3]
    $region5: #{inv_dynamics_continuous_forward.1} parent=1 // pred_fallthru
      _
    // Predicated region
    $region6: #{inv_dynamics_continuous_forward.1} parent=1 // pred_check
      _
    $region7: #{inv_dynamics_continuous_forward.1} parent=1 // pred_check_branch
      %25 = sbr.rel (0) target = $region9
    $region8: #{inv_dynamics_continuous_forward.1} parent=1 // pred_region
      %s27 = ssub.s32 128, 128
      %28 = vsyncadd [#allocation6], %s27
      %s30 = sshll.u32 [#allocation5], 4
      %s31 = int_to_ptr.vmem [resolvable:$true] %s30
      %33 = dma.hbm_to_vmem [thread:$0]  %s1, 128, %s31, [#allocation6]
    $region9: #{inv_dynamics_continuous_forward.1} parent=1 // pred_fallthru
      _
    // Predicated region
    $region10: #{inv_dynamics_continuous_forward.1} parent=1 // pred_check
      _
    $region11: #{inv_dynamics_continuous_forward.1} parent=1 // pred_check_branch
      %35 = sbr.rel (0) target = $region13
    $region12: #{inv_dynamics_continuous_forward.1} parent=1 // pred_region
      %s37 = ssub.s32 512, 512
      %38 = vsyncadd [#allocation6], %s37
      %s39 = sshll.u32 [#allocation7], 4
      %s40 = int_to_ptr.vmem [resolvable:$true] %s39
      %45 = dma.hbm_to_vmem [thread:$0]  %s2, 512, %s40, [#allocation6], 128, 128, 8
    $region13: #{inv_dynamics_continuous_forward.1} parent=1 // pred_fallthru
      _
    // Predicated region
    $region14: #{inv_dynamics_continuous_forward.1} parent=1 // pred_check
      _
    $region15: #{inv_dynamics_continuous_forward.1} parent=1 // pred_check_branch
      %47 = sbr.rel (0) target = $region17
    $region16: #{inv_dynamics_continuous_forward.1} parent=1 // pred_region
      %s49 = ssub.s32 10240, 10240
      %50 = vsyncadd [#allocation9], %s49
      %s51 = sshll.u32 [#allocation8], 4
      %s52 = int_to_ptr.vmem [resolvable:$true] %s51
      %57 = dma.hbm_to_vmem [thread:$0]  %s3, 10240, %s52, [#allocation9], 128, 128, 8
    $region17: #{inv_dynamics_continuous_forward.1} parent=1 // pred_fallthru
      _
    // Predicated region
    $region18: #{inv_dynamics_continuous_forward.1} parent=1 // pred_check
      _
    $region19: #{inv_dynamics_continuous_forward.1} parent=1 // pred_check_branch
      %59 = sbr.rel (0) target = $region21
    $region20: #{inv_dynamics_continuous_forward.1} parent=1 // pred_region
      _
    $region21: #{inv_dynamics_continuous_forward.1} parent=1 // pred_fallthru
      _
    // Predicated region
    $region22: #{inv_dynamics_continuous_forward.1} parent=1 // pred_check
      _
    $region23: #{inv_dynamics_continuous_forward.1} parent=1 // pred_check_branch
      %61 = sbr.rel (0) target = $region25
    $region24: #{inv_dynamics_continuous_forward.1} parent=1 // pred_region
      %62 = dma.done [#allocation3], 128
    $region25: #{inv_dynamics_continuous_forward.1} parent=1 // pred_fallthru
      _
    // Predicated region
    $region26: #{inv_dynamics_continuous_forward.1} parent=1 // pred_check
      _
    $region27: #{inv_dynamics_continuous_forward.1} parent=1 // pred_check_branch
      %64 = sbr.rel (0) target = $region29
    $region28: #{inv_dynamics_continuous_forward.1} parent=1 // pred_region
      %65 = dma.done [#allocation6], 128
    $region29: #{inv_dynamics_continuous_forward.1} parent=1 // pred_fallthru
      _
    // Predicated region
    $region30: #{inv_dynamics_continuous_forward.1} parent=1 // pred_check
      _
    $region31: #{inv_dynamics_continuous_forward.1} parent=1 // pred_check_branch
      %67 = sbr.rel (0) target = $region33
    $region32: #{inv_dynamics_continuous_forward.1} parent=1 // pred_region
      %68 = dma.done [#allocation6], 512
    $region33: #{inv_dynamics_continuous_forward.1} parent=1 // pred_fallthru
      _
    // Predicated region
    $region34: #{inv_dynamics_continuous_forward.1} parent=1 // pred_check
      _
    $region35: #{inv_dynamics_continuous_forward.1} parent=1 // pred_check_branch
      %70 = sbr.rel (0) target = $region37
    $region36: #{inv_dynamics_continuous_forward.1} parent=1 // pred_region
      %71 = dma.done [#allocation9], 10240
    $region37: #{inv_dynamics_continuous_forward.1} parent=1 // pred_fallthru
      _
    %v72 = vld [vmem:[%s4] sm:$0x3f]
    %v73 = vld [vmem:[#allocation2] sm:$0xff]
    %v74 = vld [vmem:[#allocation7] sm:$0xff]
    %v75 = vld [vmem:[#allocation7 + $0x8] sm:$0xff]
    %v76 = vld [vmem:[#allocation5] sm:$0xff]
    %s77 = scalar_lea.vmem [#allocation7], 16
    %v78 = vld [vmem:[%s77] sm:$0xff]
    %v79 = vld [vmem:[%s77 + $0x8] sm:$0xff]
    %vm80 = vcmask 130048
    %v82 = vsel %vm80, %v76, 0
    %84 = vmatprep.subr.mxu0 0.0
    %85 = vmatpush1.msra.mxu0 %v78
    %86 = vmatprep.subr.mxu0 0.0
    %87 = vmatpush1.msra.mxu0 %v79
    %88 = vmatprep.subr.mxu0 0.0
    %89 = vmatpush1.msra.mxu0 0.0
    %90 = vmatprep.subr.mxu0 0.0
    %91 = vmatpush1.msra.mxu0 0.0
    %92 = vmatprep.subr.mxu0 0.0
    %93 = vmatpush1.msra.mxu0 0.0
    %94 = vmatprep.subr.mxu0 0.0
    %95 = vmatpush1.msra.mxu0 0.0
    %96 = vmatprep.subr.mxu0 0.0
    %97 = vmatpush1.msra.mxu0 0.0
    %98 = vmatprep.subr.mxu0 0.0
    %99 = vmatpush1.msra.mxu0 0.0
    %100 = vmatprep.subr.mxu0 0.0
    %101 = vmatpush1.msra.mxu0 0.0
    %102 = vmatprep.subr.mxu0 0.0
    %103 = vmatpush1.msra.mxu0 0.0
    %104 = vmatprep.subr.mxu0 0.0
    %105 = vmatpush1.msra.mxu0 0.0
    %106 = vmatprep.subr.mxu0 0.0
    %107 = vmatpush1.msra.mxu0 0.0
    %108 = vmatprep.subr.mxu0 0.0
    %109 = vmatpush1.msra.mxu0 0.0
    %110 = vmatprep.subr.mxu0 0.0
    %111 = vmatpush1.msra.mxu0 0.0
    %112 = vmatprep.subr.mxu0 0.0
    %113 = vmatpush1.msra.mxu0 0.0
    %114 = vmatprep.subr.mxu0 0.0
    %115 = vmatpush1.msra.mxu0 0.0
    %116 = vmatprep.subr.mxu0 0.0
    %117 = vmatpush1.msra.mxu0 0.0
    %118 = vmatprep.subr.mxu0 0.0
    %119 = vmatpush1.msra.mxu0 0.0
    %120 = vmatprep.subr.mxu0 0.0
    %121 = vmatpush1.msra.mxu0 0.0
    %122 = vmatprep.subr.mxu0 0.0
    %123 = vmatpush1.msra.mxu0 0.0
    %124 = vmatprep.subr.mxu0 0.0
    %125 = vmatpush1.msra.mxu0 0.0
    %126 = vmatprep.subr.mxu0 0.0
    %127 = vmatpush1.msra.mxu0 0.0
    %128 = vmatprep.subr.mxu0 0.0
    %129 = vmatpush1.msra.mxu0 0.0
    %130 = vmatprep.subr.mxu0 0.0
    %131 = vmatpush1.msra.mxu0 0.0
    %132 = vmatprep.subr.mxu0 0.0
    %133 = vmatpush1.msra.mxu0 0.0
    %134 = vmatprep.subr.mxu0 0.0
    %135 = vmatpush1.msra.mxu0 0.0
    %136 = vmatprep.subr.mxu0 0.0
    %137 = vmatpush1.msra.mxu0 0.0
    %138 = vmatprep.subr.mxu0 0.0
    %139 = vmatpush1.msra.mxu0 0.0
    %140 = vmatprep.subr.mxu0 0.0
    %141 = vmatpush1.msra.mxu0 0.0
    %142 = vmatprep.subr.mxu0 0.0
    %143 = vmatpush1.msra.mxu0 0.0
    %144 = vmatprep.subr.mxu0 0.0
    %145 = vmatpush1.msra.mxu0 0.0
    %146 = vmatprep.subr.mxu0 0.0
    %147 = vmatpush1.msra.mxu0 0.0
    %148 = vmatprep.mubr.f32.mxu0 0.0
    %149 = vmatmul.mubr.f32.gmra.mrb[0].mxu0 %v82
    %v150 = vpop.f32.mrb[0].mxu0
    %v151 = vadd.f32 0.0, %v150
    %v152 = vpop.f32.mrb[0].mxu0
    %153 = vdwg.mxu0
    %v155 = vsel %vm80, %v73, 0
    %157 = vmatprep.subr.mxu0 0.0
    %158 = vmatpush1.msra.mxu0 %v74
    %159 = vmatprep.subr.mxu0 0.0
    %160 = vmatpush1.msra.mxu0 %v75
    %161 = vmatprep.subr.mxu0 0.0
    %162 = vmatpush1.msra.mxu0 0.0
    %163 = vmatprep.subr.mxu0 0.0
    %164 = vmatpush1.msra.mxu0 0.0
    %165 = vmatprep.subr.mxu0 0.0
    %166 = vmatpush1.msra.mxu0 0.0
    %167 = vmatprep.subr.mxu0 0.0
    %168 = vmatpush1.msra.mxu0 0.0
    %169 = vmatprep.subr.mxu0 0.0
    %170 = vmatpush1.msra.mxu0 0.0
    %171 = vmatprep.subr.mxu0 0.0
    %172 = vmatpush1.msra.mxu0 0.0
    %173 = vmatprep.subr.mxu0 0.0
    %174 = vmatpush1.msra.mxu0 0.0
    %175 = vmatprep.subr.mxu0 0.0
    %176 = vmatpush1.msra.mxu0 0.0
    %177 = vmatprep.subr.mxu0 0.0
    %178 = vmatpush1.msra.mxu0 0.0
    %179 = vmatprep.subr.mxu0 0.0
    %180 = vmatpush1.msra.mxu0 0.0
    %181 = vmatprep.subr.mxu0 0.0
    %182 = vmatpush1.msra.mxu0 0.0
    %183 = vmatprep.subr.mxu0 0.0
    %184 = vmatpush1.msra.mxu0 0.0
    %185 = vmatprep.subr.mxu0 0.0
    %186 = vmatpush1.msra.mxu0 0.0
    %187 = vmatprep.subr.mxu0 0.0
    %188 = vmatpush1.msra.mxu0 0.0
    %189 = vmatprep.subr.mxu0 0.0
    %190 = vmatpush1.msra.mxu0 0.0
    %191 = vmatprep.subr.mxu0 0.0
    %192 = vmatpush1.msra.mxu0 0.0
    %193 = vmatprep.subr.mxu0 0.0
    %194 = vmatpush1.msra.mxu0 0.0
    %195 = vmatprep.subr.mxu0 0.0
    %196 = vmatpush1.msra.mxu0 0.0
    %197 = vmatprep.subr.mxu0 0.0
    %198 = vmatpush1.msra.mxu0 0.0
    %199 = vmatprep.subr.mxu0 0.0
    %200 = vmatpush1.msra.mxu0 0.0
    %201 = vmatprep.subr.mxu0 0.0
    %202 = vmatpush1.msra.mxu0 0.0
    %203 = vmatprep.subr.mxu0 0.0
    %204 = vmatpush1.msra.mxu0 0.0
    %205 = vmatprep.subr.mxu0 0.0
    %206 = vmatpush1.msra.mxu0 0.0
    %207 = vmatprep.subr.mxu0 0.0
    %208 = vmatpush1.msra.mxu0 0.0
    %209 = vmatprep.subr.mxu0 0.0
    %210 = vmatpush1.msra.mxu0 0.0
    %211 = vmatprep.subr.mxu0 0.0
    %212 = vmatpush1.msra.mxu0 0.0
    %213 = vmatprep.subr.mxu0 0.0
    %214 = vmatpush1.msra.mxu0 0.0
    %215 = vmatprep.subr.mxu0 0.0
    %216 = vmatpush1.msra.mxu0 0.0
    %217 = vmatprep.subr.mxu0 0.0
    %218 = vmatpush1.msra.mxu0 0.0
    %219 = vmatprep.subr.mxu0 0.0
    %220 = vmatpush1.msra.mxu0 0.0
    %221 = vmatprep.mubr.f32.mxu0 0.0
    %222 = vmatmul.mubr.f32.gmra.mrb[0].mxu0 %v155
    %v223 = vpop.f32.mrb[0].mxu0
    %v224 = vadd.f32 %v151, %v223
    %v225 = vpop.f32.mrb[0].mxu0
    %226 = vdwg.mxu0
    %v227 = vlaneseq
    %v228 = vshrl.u32 %v227, 7
    %v229 = vsub.s32 0, %v228
    %v230 = vrot.slane %v72, %v229
    %v231 = vadd.f32 %v224, %v230
    %vm232 = vcmp.ge.f32.partialorder %v231, 0.0
    %v233 = vmul.f32 %v231, 0.001
    %v234 = vsel %vm232, %v231, %v233
    %v235 = vld [vmem:[#allocation8] sm:$0xff]
    %v236 = vld [vmem:[#allocation8 + $0x8] sm:$0xff]
    %v237 = vld [vmem:[#allocation8 + $0x10] sm:$0xff]
    %v238 = vld [vmem:[#allocation8 + $0x18] sm:$0xff]
    %v239 = vld [vmem:[#allocation8 + $0x20] sm:$0xff]
    %v240 = vld [vmem:[#allocation8 + $0x28] sm:$0xff]
    %v241 = vld [vmem:[#allocation8 + $0x30] sm:$0xff]
    %v242 = vld [vmem:[#allocation8 + $0x38] sm:$0xff]
    %v243 = vld [vmem:[#allocation8 + $0x40] sm:$0xff]
    %v244 = vld [vmem:[#allocation8 + $0x48] sm:$0xff]
    %v245 = vld [vmem:[#allocation8 + $0x50] sm:$0xff]
    %v246 = vld [vmem:[#allocation8 + $0x58] sm:$0xff]
    %v247 = vld [vmem:[#allocation8 + $0x60] sm:$0xff]
    %v248 = vld [vmem:[#allocation8 + $0x68] sm:$0xff]
    %v249 = vld [vmem:[#allocation8 + $0x70] sm:$0xff]
    %v250 = vld [vmem:[#allocation8 + $0x78] sm:$0xff]
    %v251 = vlaneseq
    %v252 = vshrl.u32 %v251, 7
    %v253 = vsub.s32 1, %v252
    %v254 = vrot.slane %v72, %v253
    %255 = vmatprep.subr.mxu0 0.0
    %256 = vmatpush1.msra.mxu0 %v235
    %257 = vmatprep.subr.mxu0 0.0
    %258 = vmatpush1.msra.mxu0 %v236
    %259 = vmatprep.subr.mxu0 0.0
    %260 = vmatpush1.msra.mxu0 %v237
    %261 = vmatprep.subr.mxu0 0.0
    %262 = vmatpush1.msra.mxu0 %v238
    %263 = vmatprep.subr.mxu0 0.0
    %264 = vmatpush1.msra.mxu0 %v239
    %265 = vmatprep.subr.mxu0 0.0
    %266 = vmatpush1.msra.mxu0 %v240
    %267 = vmatprep.subr.mxu0 0.0
    %268 = vmatpush1.msra.mxu0 %v241
    %269 = vmatprep.subr.mxu0 0.0
    %270 = vmatpush1.msra.mxu0 %v242
    %271 = vmatprep.subr.mxu0 0.0
    %272 = vmatpush1.msra.mxu0 %v243
    %273 = vmatprep.subr.mxu0 0.0
    %274 = vmatpush1.msra.mxu0 %v244
    %275 = vmatprep.subr.mxu0 0.0
    %276 = vmatpush1.msra.mxu0 %v245
    %277 = vmatprep.subr.mxu0 0.0
    %278 = vmatpush1.msra.mxu0 %v246
    %279 = vmatprep.subr.mxu0 0.0
    %280 = vmatpush1.msra.mxu0 %v247
    %281 = vmatprep.subr.mxu0 0.0
    %282 = vmatpush1.msra.mxu0 %v248
    %283 = vmatprep.subr.mxu0 0.0
    %284 = vmatpush1.msra.mxu0 %v249
    %285 = vmatprep.subr.mxu0 0.0
    %286 = vmatpush1.msra.mxu0 %v250
    %287 = vmatprep.subr.mxu0 0.0
    %288 = vmatpush1.msra.mxu0 0.0
    %289 = vmatprep.subr.mxu0 0.0
    %290 = vmatpush1.msra.mxu0 0.0
    %291 = vmatprep.subr.mxu0 0.0
    %292 = vmatpush1.msra.mxu0 0.0
    %293 = vmatprep.subr.mxu0 0.0
    %294 = vmatpush1.msra.mxu0 0.0
    %295 = vmatprep.subr.mxu0 0.0
    %296 = vmatpush1.msra.mxu0 0.0
    %297 = vmatprep.subr.mxu0 0.0
    %298 = vmatpush1.msra.mxu0 0.0
    %299 = vmatprep.subr.mxu0 0.0
    %300 = vmatpush1.msra.mxu0 0.0
    %301 = vmatprep.subr.mxu0 0.0
    %302 = vmatpush1.msra.mxu0 0.0
    %303 = vmatprep.subr.mxu0 0.0
    %304 = vmatpush1.msra.mxu0 0.0
    %305 = vmatprep.subr.mxu0 0.0
    %306 = vmatpush1.msra.mxu0 0.0
    %307 = vmatprep.subr.mxu0 0.0
    %308 = vmatpush1.msra.mxu0 0.0
    %309 = vmatprep.subr.mxu0 0.0
    %310 = vmatpush1.msra.mxu0 0.0
    %311 = vmatprep.subr.mxu0 0.0
    %312 = vmatpush1.msra.mxu0 0.0
    %313 = vmatprep.subr.mxu0 0.0
    %314 = vmatpush1.msra.mxu0 0.0
    %315 = vmatprep.subr.mxu0 0.0
    %316 = vmatpush1.msra.mxu0 0.0
    %317 = vmatprep.subr.mxu0 0.0
    %318 = vmatpush1.msra.mxu0 0.0
    %319 = vmatprep.mubr.f32.mxu0 0.0
    %320 = vmatmul.mubr.f32.gmra.mrb[0].mxu0 %v234
    %v321 = vpop.f32.mrb[0].mxu0
    %v322 = vadd.f32 %v254, %v321
    %v323 = vpop.f32.mrb[0].mxu0
    %324 = vdwg.mxu0
    %vm325 = vcmp.ge.f32.partialorder %v322, 0.0
    %v326 = vmul.f32 %v322, 0.001
    %v327 = vsel %vm325, %v322, %v326
    %s328 = scalar_lea.vmem [#allocation8], 128
    %v329 = vld [vmem:[%s328] sm:$0xff]
    %v330 = vld [vmem:[%s328 + $0x8] sm:$0xff]
    %v331 = vld [vmem:[%s328 + $0x10] sm:$0xff]
    %v332 = vld [vmem:[%s328 + $0x18] sm:$0xff]
    %v333 = vld [vmem:[%s328 + $0x20] sm:$0xff]
    %v334 = vld [vmem:[%s328 + $0x28] sm:$0xff]
    %v335 = vld [vmem:[%s328 + $0x30] sm:$0xff]
    %v336 = vld [vmem:[%s328 + $0x38] sm:$0xff]
    %v337 = vld [vmem:[%s328 + $0x40] sm:$0xff]
    %v338 = vld [vmem:[%s328 + $0x48] sm:$0xff]
    %v339 = vld [vmem:[%s328 + $0x50] sm:$0xff]
    %v340 = vld [vmem:[%s328 + $0x58] sm:$0xff]
    %v341 = vld [vmem:[%s328 + $0x60] sm:$0xff]
    %v342 = vld [vmem:[%s328 + $0x68] sm:$0xff]
    %v343 = vld [vmem:[%s328 + $0x70] sm:$0xff]
    %v344 = vld [vmem:[%s328 + $0x78] sm:$0xff]
    %v345 = vlaneseq
    %v346 = vshrl.u32 %v345, 7
    %v347 = vsub.s32 2, %v346
    %v348 = vrot.slane %v72, %v347
    %349 = vmatprep.subr.mxu0 0.0
    %350 = vmatpush1.msra.mxu0 %v329
    %351 = vmatprep.subr.mxu0 0.0
    %352 = vmatpush1.msra.mxu0 %v330
    %353 = vmatprep.subr.mxu0 0.0
    %354 = vmatpush1.msra.mxu0 %v331
    %355 = vmatprep.subr.mxu0 0.0
    %356 = vmatpush1.msra.mxu0 %v332
    %357 = vmatprep.subr.mxu0 0.0
    %358 = vmatpush1.msra.mxu0 %v333
    %359 = vmatprep.subr.mxu0 0.0
    %360 = vmatpush1.msra.mxu0 %v334
    %361 = vmatprep.subr.mxu0 0.0
    %362 = vmatpush1.msra.mxu0 %v335
    %363 = vmatprep.subr.mxu0 0.0
    %364 = vmatpush1.msra.mxu0 %v336
    %365 = vmatprep.subr.mxu0 0.0
    %366 = vmatpush1.msra.mxu0 %v337
    %367 = vmatprep.subr.mxu0 0.0
    %368 = vmatpush1.msra.mxu0 %v338
    %369 = vmatprep.subr.mxu0 0.0
    %370 = vmatpush1.msra.mxu0 %v339
    %371 = vmatprep.subr.mxu0 0.0
    %372 = vmatpush1.msra.mxu0 %v340
    %373 = vmatprep.subr.mxu0 0.0
    %374 = vmatpush1.msra.mxu0 %v341
    %375 = vmatprep.subr.mxu0 0.0
    %376 = vmatpush1.msra.mxu0 %v342
    %377 = vmatprep.subr.mxu0 0.0
    %378 = vmatpush1.msra.mxu0 %v343
    %379 = vmatprep.subr.mxu0 0.0
    %380 = vmatpush1.msra.mxu0 %v344
    %381 = vmatprep.subr.mxu0 0.0
    %382 = vmatpush1.msra.mxu0 0.0
    %383 = vmatprep.subr.mxu0 0.0
    %384 = vmatpush1.msra.mxu0 0.0
    %385 = vmatprep.subr.mxu0 0.0
    %386 = vmatpush1.msra.mxu0 0.0
    %387 = vmatprep.subr.mxu0 0.0
    %388 = vmatpush1.msra.mxu0 0.0
    %389 = vmatprep.subr.mxu0 0.0
    %390 = vmatpush1.msra.mxu0 0.0
    %391 = vmatprep.subr.mxu0 0.0
    %392 = vmatpush1.msra.mxu0 0.0
    %393 = vmatprep.subr.mxu0 0.0
    %394 = vmatpush1.msra.mxu0 0.0
    %395 = vmatprep.subr.mxu0 0.0
    %396 = vmatpush1.msra.mxu0 0.0
    %397 = vmatprep.subr.mxu0 0.0
    %398 = vmatpush1.msra.mxu0 0.0
    %399 = vmatprep.subr.mxu0 0.0
    %400 = vmatpush1.msra.mxu0 0.0
    %401 = vmatprep.subr.mxu0 0.0
    %402 = vmatpush1.msra.mxu0 0.0
    %403 = vmatprep.subr.mxu0 0.0
    %404 = vmatpush1.msra.mxu0 0.0
    %405 = vmatprep.subr.mxu0 0.0
    %406 = vmatpush1.msra.mxu0 0.0
    %407 = vmatprep.subr.mxu0 0.0
    %408 = vmatpush1.msra.mxu0 0.0
    %409 = vmatprep.subr.mxu0 0.0
    %410 = vmatpush1.msra.mxu0 0.0
    %411 = vmatprep.subr.mxu0 0.0
    %412 = vmatpush1.msra.mxu0 0.0
    %413 = vmatprep.mubr.f32.mxu0 0.0
    %414 = vmatmul.mubr.f32.gmra.mrb[0].mxu0 %v327
    %v415 = vpop.f32.mrb[0].mxu0
    %v416 = vadd.f32 %v348, %v415
    %v417 = vpop.f32.mrb[0].mxu0
    %418 = vdwg.mxu0
    %vm419 = vcmp.ge.f32.partialorder %v416, 0.0
    %v420 = vmul.f32 %v416, 0.001
    %v421 = vsel %vm419, %v416, %v420
    %s422 = scalar_lea.vmem [#allocation8], 256
    %v423 = vld [vmem:[%s422] sm:$0xff]
    %v424 = vld [vmem:[%s422 + $0x8] sm:$0xff]
    %v425 = vld [vmem:[%s422 + $0x10] sm:$0xff]
    %v426 = vld [vmem:[%s422 + $0x18] sm:$0xff]
    %v427 = vld [vmem:[%s422 + $0x20] sm:$0xff]
    %v428 = vld [vmem:[%s422 + $0x28] sm:$0xff]
    %v429 = vld [vmem:[%s422 + $0x30] sm:$0xff]
    %v430 = vld [vmem:[%s422 + $0x38] sm:$0xff]
    %v431 = vld [vmem:[%s422 + $0x40] sm:$0xff]
    %v432 = vld [vmem:[%s422 + $0x48] sm:$0xff]
    %v433 = vld [vmem:[%s422 + $0x50] sm:$0xff]
    %v434 = vld [vmem:[%s422 + $0x58] sm:$0xff]
    %v435 = vld [vmem:[%s422 + $0x60] sm:$0xff]
    %v436 = vld [vmem:[%s422 + $0x68] sm:$0xff]
    %v437 = vld [vmem:[%s422 + $0x70] sm:$0xff]
    %v438 = vld [vmem:[%s422 + $0x78] sm:$0xff]
    %v439 = vlaneseq
    %v440 = vshrl.u32 %v439, 7
    %v441 = vsub.s32 3, %v440
    %v442 = vrot.slane %v72, %v441
    %443 = vmatprep.subr.mxu0 0.0
    %444 = vmatpush1.msra.mxu0 %v423
    %445 = vmatprep.subr.mxu0 0.0
    %446 = vmatpush1.msra.mxu0 %v424
    %447 = vmatprep.subr.mxu0 0.0
    %448 = vmatpush1.msra.mxu0 %v425
    %449 = vmatprep.subr.mxu0 0.0
    %450 = vmatpush1.msra.mxu0 %v426
    %451 = vmatprep.subr.mxu0 0.0
    %452 = vmatpush1.msra.mxu0 %v427
    %453 = vmatprep.subr.mxu0 0.0
    %454 = vmatpush1.msra.mxu0 %v428
    %455 = vmatprep.subr.mxu0 0.0
    %456 = vmatpush1.msra.mxu0 %v429
    %457 = vmatprep.subr.mxu0 0.0
    %458 = vmatpush1.msra.mxu0 %v430
    %459 = vmatprep.subr.mxu0 0.0
    %460 = vmatpush1.msra.mxu0 %v431
    %461 = vmatprep.subr.mxu0 0.0
    %462 = vmatpush1.msra.mxu0 %v432
    %463 = vmatprep.subr.mxu0 0.0
    %464 = vmatpush1.msra.mxu0 %v433
    %465 = vmatprep.subr.mxu0 0.0
    %466 = vmatpush1.msra.mxu0 %v434
    %467 = vmatprep.subr.mxu0 0.0
    %468 = vmatpush1.msra.mxu0 %v435
    %469 = vmatprep.subr.mxu0 0.0
    %470 = vmatpush1.msra.mxu0 %v436
    %471 = vmatprep.subr.mxu0 0.0
    %472 = vmatpush1.msra.mxu0 %v437
    %473 = vmatprep.subr.mxu0 0.0
    %474 = vmatpush1.msra.mxu0 %v438
    %475 = vmatprep.subr.mxu0 0.0
    %476 = vmatpush1.msra.mxu0 0.0
    %477 = vmatprep.subr.mxu0 0.0
    %478 = vmatpush1.msra.mxu0 0.0
    %479 = vmatprep.subr.mxu0 0.0
    %480 = vmatpush1.msra.mxu0 0.0
    %481 = vmatprep.subr.mxu0 0.0
    %482 = vmatpush1.msra.mxu0 0.0
    %483 = vmatprep.subr.mxu0 0.0
    %484 = vmatpush1.msra.mxu0 0.0
    %485 = vmatprep.subr.mxu0 0.0
    %486 = vmatpush1.msra.mxu0 0.0
    %487 = vmatprep.subr.mxu0 0.0
    %488 = vmatpush1.msra.mxu0 0.0
    %489 = vmatprep.subr.mxu0 0.0
    %490 = vmatpush1.msra.mxu0 0.0
    %491 = vmatprep.subr.mxu0 0.0
    %492 = vmatpush1.msra.mxu0 0.0
    %493 = vmatprep.subr.mxu0 0.0
    %494 = vmatpush1.msra.mxu0 0.0
    %495 = vmatprep.subr.mxu0 0.0
    %496 = vmatpush1.msra.mxu0 0.0
    %497 = vmatprep.subr.mxu0 0.0
    %498 = vmatpush1.msra.mxu0 0.0
    %499 = vmatprep.subr.mxu0 0.0
    %500 = vmatpush1.msra.mxu0 0.0
    %501 = vmatprep.subr.mxu0 0.0
    %502 = vmatpush1.msra.mxu0 0.0
    %503 = vmatprep.subr.mxu0 0.0
    %504 = vmatpush1.msra.mxu0 0.0
    %505 = vmatprep.subr.mxu0 0.0
    %506 = vmatpush1.msra.mxu0 0.0
    %507 = vmatprep.mubr.f32.mxu0 0.0
    %508 = vmatmul.mubr.f32.gmra.mrb[0].mxu0 %v421
    %v509 = vpop.f32.mrb[0].mxu0
    %v510 = vadd.f32 %v442, %v509
    %v511 = vpop.f32.mrb[0].mxu0
    %512 = vdwg.mxu0
    %vm513 = vcmp.ge.f32.partialorder %v510, 0.0
    %v514 = vmul.f32 %v510, 0.001
    %v515 = vsel %vm513, %v510, %v514
    %s516 = scalar_lea.vmem [#allocation8], 384
    %v517 = vld [vmem:[%s516] sm:$0xff]
    %v518 = vld [vmem:[%s516 + $0x8] sm:$0xff]
    %v519 = vld [vmem:[%s516 + $0x10] sm:$0xff]
    %v520 = vld [vmem:[%s516 + $0x18] sm:$0xff]
    %v521 = vld [vmem:[%s516 + $0x20] sm:$0xff]
    %v522 = vld [vmem:[%s516 + $0x28] sm:$0xff]
    %v523 = vld [vmem:[%s516 + $0x30] sm:$0xff]
    %v524 = vld [vmem:[%s516 + $0x38] sm:$0xff]
    %v525 = vld [vmem:[%s516 + $0x40] sm:$0xff]
    %v526 = vld [vmem:[%s516 + $0x48] sm:$0xff]
    %v527 = vld [vmem:[%s516 + $0x50] sm:$0xff]
    %v528 = vld [vmem:[%s516 + $0x58] sm:$0xff]
    %v529 = vld [vmem:[%s516 + $0x60] sm:$0xff]
    %v530 = vld [vmem:[%s516 + $0x68] sm:$0xff]
    %v531 = vld [vmem:[%s516 + $0x70] sm:$0xff]
    %v532 = vld [vmem:[%s516 + $0x78] sm:$0xff]
    %v533 = vlaneseq
    %v534 = vshrl.u32 %v533, 7
    %v535 = vsub.s32 4, %v534
    %v536 = vrot.slane %v72, %v535
    %537 = vmatprep.subr.mxu0 0.0
    %538 = vmatpush1.msra.mxu0 %v517
    %539 = vmatprep.subr.mxu0 0.0
    %540 = vmatpush1.msra.mxu0 %v518
    %541 = vmatprep.subr.mxu0 0.0
    %542 = vmatpush1.msra.mxu0 %v519
    %543 = vmatprep.subr.mxu0 0.0
    %544 = vmatpush1.msra.mxu0 %v520
    %545 = vmatprep.subr.mxu0 0.0
    %546 = vmatpush1.msra.mxu0 %v521
    %547 = vmatprep.subr.mxu0 0.0
    %548 = vmatpush1.msra.mxu0 %v522
    %549 = vmatprep.subr.mxu0 0.0
    %550 = vmatpush1.msra.mxu0 %v523
    %551 = vmatprep.subr.mxu0 0.0
    %552 = vmatpush1.msra.mxu0 %v524
    %553 = vmatprep.subr.mxu0 0.0
    %554 = vmatpush1.msra.mxu0 %v525
    %555 = vmatprep.subr.mxu0 0.0
    %556 = vmatpush1.msra.mxu0 %v526
    %557 = vmatprep.subr.mxu0 0.0
    %558 = vmatpush1.msra.mxu0 %v527
    %559 = vmatprep.subr.mxu0 0.0
    %560 = vmatpush1.msra.mxu0 %v528
    %561 = vmatprep.subr.mxu0 0.0
    %562 = vmatpush1.msra.mxu0 %v529
    %563 = vmatprep.subr.mxu0 0.0
    %564 = vmatpush1.msra.mxu0 %v530
    %565 = vmatprep.subr.mxu0 0.0
    %566 = vmatpush1.msra.mxu0 %v531
    %567 = vmatprep.subr.mxu0 0.0
    %568 = vmatpush1.msra.mxu0 %v532
    %569 = vmatprep.subr.mxu0 0.0
    %570 = vmatpush1.msra.mxu0 0.0
    %571 = vmatprep.subr.mxu0 0.0
    %572 = vmatpush1.msra.mxu0 0.0
    %573 = vmatprep.subr.mxu0 0.0
    %574 = vmatpush1.msra.mxu0 0.0
    %575 = vmatprep.subr.mxu0 0.0
    %576 = vmatpush1.msra.mxu0 0.0
    %577 = vmatprep.subr.mxu0 0.0
    %578 = vmatpush1.msra.mxu0 0.0
    %579 = vmatprep.subr.mxu0 0.0
    %580 = vmatpush1.msra.mxu0 0.0
    %581 = vmatprep.subr.mxu0 0.0
    %582 = vmatpush1.msra.mxu0 0.0
    %583 = vmatprep.subr.mxu0 0.0
    %584 = vmatpush1.msra.mxu0 0.0
    %585 = vmatprep.subr.mxu0 0.0
    %586 = vmatpush1.msra.mxu0 0.0
    %587 = vmatprep.subr.mxu0 0.0
    %588 = vmatpush1.msra.mxu0 0.0
    %589 = vmatprep.subr.mxu0 0.0
    %590 = vmatpush1.msra.mxu0 0.0
    %591 = vmatprep.subr.mxu0 0.0
    %592 = vmatpush1.msra.mxu0 0.0
    %593 = vmatprep.subr.mxu0 0.0
    %594 = vmatpush1.msra.mxu0 0.0
    %595 = vmatprep.subr.mxu0 0.0
    %596 = vmatpush1.msra.mxu0 0.0
    %597 = vmatprep.subr.mxu0 0.0
    %598 = vmatpush1.msra.mxu0 0.0
    %599 = vmatprep.subr.mxu0 0.0
    %600 = vmatpush1.msra.mxu0 0.0
    %601 = vmatprep.mubr.f32.mxu0 0.0
    %602 = vmatmul.mubr.f32.gmra.mrb[0].mxu0 %v515
    %v603 = vpop.f32.mrb[0].mxu0
    %v604 = vadd.f32 %v536, %v603
    %v605 = vpop.f32.mrb[0].mxu0
    %606 = vdwg.mxu0
    %vm607 = vcmp.ge.f32.partialorder %v604, 0.0
    %v608 = vmul.f32 %v604, 0.001
    %v609 = vsel %vm607, %v604, %v608
    %s610 = scalar_lea.vmem [#allocation8], 512
    %v611 = vld [vmem:[%s610] sm:$0xff]
    %v612 = vld [vmem:[%s610 + $0x8] sm:$0xff]
    %v613 = vld [vmem:[%s610 + $0x10] sm:$0xff]
    %v614 = vld [vmem:[%s610 + $0x18] sm:$0xff]
    %v615 = vld [vmem:[%s610 + $0x20] sm:$0xff]
    %v616 = vld [vmem:[%s610 + $0x28] sm:$0xff]
    %v617 = vld [vmem:[%s610 + $0x30] sm:$0xff]
    %v618 = vld [vmem:[%s610 + $0x38] sm:$0xff]
    %v619 = vld [vmem:[%s610 + $0x40] sm:$0xff]
    %v620 = vld [vmem:[%s610 + $0x48] sm:$0xff]
    %v621 = vld [vmem:[%s610 + $0x50] sm:$0xff]
    %v622 = vld [vmem:[%s610 + $0x58] sm:$0xff]
    %v623 = vld [vmem:[%s610 + $0x60] sm:$0xff]
    %v624 = vld [vmem:[%s610 + $0x68] sm:$0xff]
    %v625 = vld [vmem:[%s610 + $0x70] sm:$0xff]
    %v626 = vld [vmem:[%s610 + $0x78] sm:$0xff]
    %v627 = vlaneseq
    %v628 = vshrl.u32 %v627, 7
    %v629 = vsub.s32 5, %v628
    %v630 = vrot.slane %v72, %v629
    %631 = vmatprep.subr.mxu0 0.0
    %632 = vmatpush1.msra.mxu0 %v611
    %633 = vmatprep.subr.mxu0 0.0
    %634 = vmatpush1.msra.mxu0 %v612
    %635 = vmatprep.subr.mxu0 0.0
    %636 = vmatpush1.msra.mxu0 %v613
    %637 = vmatprep.subr.mxu0 0.0
    %638 = vmatpush1.msra.mxu0 %v614
    %639 = vmatprep.subr.mxu0 0.0
    %640 = vmatpush1.msra.mxu0 %v615
    %641 = vmatprep.subr.mxu0 0.0
    %642 = vmatpush1.msra.mxu0 %v616
    %643 = vmatprep.subr.mxu0 0.0
    %644 = vmatpush1.msra.mxu0 %v617
    %645 = vmatprep.subr.mxu0 0.0
    %646 = vmatpush1.msra.mxu0 %v618
    %647 = vmatprep.subr.mxu0 0.0
    %648 = vmatpush1.msra.mxu0 %v619
    %649 = vmatprep.subr.mxu0 0.0
    %650 = vmatpush1.msra.mxu0 %v620
    %651 = vmatprep.subr.mxu0 0.0
    %652 = vmatpush1.msra.mxu0 %v621
    %653 = vmatprep.subr.mxu0 0.0
    %654 = vmatpush1.msra.mxu0 %v622
    %655 = vmatprep.subr.mxu0 0.0
    %656 = vmatpush1.msra.mxu0 %v623
    %657 = vmatprep.subr.mxu0 0.0
    %658 = vmatpush1.msra.mxu0 %v624
    %659 = vmatprep.subr.mxu0 0.0
    %660 = vmatpush1.msra.mxu0 %v625
    %661 = vmatprep.subr.mxu0 0.0
    %662 = vmatpush1.msra.mxu0 %v626
    %663 = vmatprep.subr.mxu0 0.0
    %664 = vmatpush1.msra.mxu0 0.0
    %665 = vmatprep.subr.mxu0 0.0
    %666 = vmatpush1.msra.mxu0 0.0
    %667 = vmatprep.subr.mxu0 0.0
    %668 = vmatpush1.msra.mxu0 0.0
    %669 = vmatprep.subr.mxu0 0.0
    %670 = vmatpush1.msra.mxu0 0.0
    %671 = vmatprep.subr.mxu0 0.0
    %672 = vmatpush1.msra.mxu0 0.0
    %673 = vmatprep.subr.mxu0 0.0
    %674 = vmatpush1.msra.mxu0 0.0
    %675 = vmatprep.subr.mxu0 0.0
    %676 = vmatpush1.msra.mxu0 0.0
    %677 = vmatprep.subr.mxu0 0.0
    %678 = vmatpush1.msra.mxu0 0.0
    %679 = vmatprep.subr.mxu0 0.0
    %680 = vmatpush1.msra.mxu0 0.0
    %681 = vmatprep.subr.mxu0 0.0
    %682 = vmatpush1.msra.mxu0 0.0
    %683 = vmatprep.subr.mxu0 0.0
    %684 = vmatpush1.msra.mxu0 0.0
    %685 = vmatprep.subr.mxu0 0.0
    %686 = vmatpush1.msra.mxu0 0.0
    %687 = vmatprep.subr.mxu0 0.0
    %688 = vmatpush1.msra.mxu0 0.0
    %689 = vmatprep.subr.mxu0 0.0
    %690 = vmatpush1.msra.mxu0 0.0
    %691 = vmatprep.subr.mxu0 0.0
    %692 = vmatpush1.msra.mxu0 0.0
    %693 = vmatprep.subr.mxu0 0.0
    %694 = vmatpush1.msra.mxu0 0.0
    %695 = vmatprep.mubr.f32.mxu0 0.0
    %696 = vmatmul.mubr.f32.gmra.mrb[0].mxu0 %v609
    %v697 = vpop.f32.mrb[0].mxu0
    %v698 = vadd.f32 %v630, %v697
    %v699 = vpop.f32.mrb[0].mxu0
    %700 = vdwg.mxu0
    %701 = vst [vmem:[#allocation10] sm:$0xff] %v698
    // Predicated region
    $region38: #{inv_dynamics_continuous_forward.1} parent=1 // pred_check
      _
    $region39: #{inv_dynamics_continuous_forward.1} parent=1 // pred_check_branch
      %703 = sbr.rel (0) target = $region41
    $region40: #{inv_dynamics_continuous_forward.1} parent=1 // pred_region
      %s705 = ssub.s32 128, 128
      %706 = vsyncadd [#allocation4], %s705
      %s708 = sshll.u32 [#allocation10], 4
      %s709 = int_to_ptr.vmem [resolvable:$true] %s708
      %711 = dma.vmem_to_hbm [thread:$0]  %s709, 128, %s5, [#allocation4]
    $region41: #{inv_dynamics_continuous_forward.1} parent=1 // pred_fallthru
      _
    // Predicated region
    $region42: #{inv_dynamics_continuous_forward.1} parent=1 // pred_check
      _
    $region43: #{inv_dynamics_continuous_forward.1} parent=1 // pred_check_branch
      %713 = sbr.rel (0) target = $region45
    $region44: #{inv_dynamics_continuous_forward.1} parent=1 // pred_region
      %714 = dma.done [#allocation4], 128
    $region45: #{inv_dynamics_continuous_forward.1} parent=1 // pred_fallthru
      _
    %715 = vsyncpa [#allocation3], 1
    %716 = vsyncpa [#allocation6], 1
    %717 = vsyncpa [#allocation9], 1
    %718 = vsyncpa [#allocation4], 1

</llo_original>
